<compile_context>
chip_gen: v5e
topology: v5e:2x2
jax: 0.10.0
libtpu: 0.0.40
codegen_flags: <defaults>
</compile_context>

<pallas_src>
import functools

import jax
import jax.numpy as jnp
from jax import lax
from jax.experimental import pallas as pl
from jax.experimental.pallas import tpu as pltpu

LANES = 128        # vreg lane width
_CHUNK_ROWS = 64   # rows per inner-loop step (keeps live vregs well under 64)


def _pick_config():
    """Return (target_block_rows, vmem_limit_bytes) for the local TPU gen."""
    try:
        kind = jax.devices()[0].device_kind.lower()
    except Exception:
        kind = ""
    if "v7" in kind:
        # v7x: ~1.6 TB/s per TC -> grow the tile so the fixed per-step
        # overhead stays <10%; 2 * (4+3) * 4096 * 128 * 4B ~= 29 MiB
        # double-buffered, inside the 48 MiB scoped limit (64 MiB physical).
        return 4096, 48 * 1024 * 1024
    # v5e / v6e: 2048-row steps already take 5-9 us, overhead is negligible.
    return 2048, 32 * 1024 * 1024


def _outconv_kernel(w_ref, b_ref, x_ref, o_ref, *, chunk_rows):
    """1x1 conv on one (1, C_in, tile_rows, 128) spatial tile.

    w_ref: SMEM (C_out, C_in) f32 scalars
    b_ref: SMEM (C_out,)      f32 scalars
    x_ref: VMEM (1, C_in,  tile_rows, 128)
    o_ref: VMEM (1, C_out, tile_rows, 128)
    """
    c_in = x_ref.shape[1]
    c_out = o_ref.shape[1]
    tile_rows = x_ref.shape[2]
    n_full = tile_rows // chunk_rows
    tail = tile_rows - n_full * chunk_rows

    # Hoist the SMEM scalar reads out of the chunk loop (perf feedback):
    # 12 weights + 3 biases are read once per tile instead of once per chunk.
    w = [[w_ref[o, c] for c in range(c_in)] for o in range(c_out)]
    b = [b_ref[o] for o in range(c_out)]

    def process(r0, nrows):
        # One (nrows, 128) slab per input channel -- full-density vregs.
        xs = [x_ref[0, c, pl.ds(r0, nrows), :].astype(jnp.float32)
              for c in range(c_in)]
        for o in range(c_out):
            acc = xs[0] * w[o][0] + b[o]
            for c in range(1, c_in):
                acc = acc + xs[c] * w[o][c]
            o_ref[0, o, pl.ds(r0, nrows), :] = acc.astype(o_ref.dtype)

    if n_full > 0:
        def body(i, carry):
            r0 = pl.multiple_of(i * chunk_rows, chunk_rows)
            process(r0, chunk_rows)
            return carry

        lax.fori_loop(0, n_full, body, 0, unroll=2 if n_full >= 2 else 1)

    if tail:  # static ragged tail (only when tile_rows % chunk_rows != 0)
        process(n_full * chunk_rows, tail)


@jax.jit
def outconv_forward(x_nchw, weight, bias):
    """1x1 Conv2d forward, equivalent to nn.Conv2d(in_ch, out_ch, 1).

    x_nchw: (N, C_in, H, W)     f32 or bf16 (output keeps the input dtype)
    weight: (C_out, C_in, 1, 1) PyTorch conv weight layout
    bias:   (C_out,)
    returns (N, C_out, H, W)
    """
    N, C_in, H, W = x_nchw.shape
    C_out = weight.shape[0]
    HW = H * W
    rows = pl.cdiv(HW, LANES)              # number of 128-lane rows
    target_rows, vmem_limit = _pick_config()

    # Lane-dense (rows, 128) view of the spatial axis: free trailing-dim
    # split when H*W % 128 == 0; otherwise a small pad is unavoidable.
    x3 = x_nchw.reshape(N, C_in, HW)
    hw_lane = rows * LANES
    if hw_lane != HW:
        # TODO(synk): this lane-remainder pad (+ matching output slice) costs
        # one extra HBM round trip; only hit when H*W % 128 != 0.
        x3 = jnp.pad(x3, ((0, 0), (0, 0), (0, hw_lane - HW)))
    x4 = x3.reshape(N, C_in, rows, LANES)

    if rows > target_rows:
        tile_rows = target_rows            # multiple of 8; ragged last block
        chunk_rows = _CHUNK_ROWS           # is clipped by Pallas (no pad)
    else:
        tile_rows = rows                   # single block == full array dim
        chunk_rows = min(_CHUNK_ROWS, rows)
    grid_s = pl.cdiv(rows, tile_rows)

    w_mat = weight.reshape(C_out, C_in).astype(jnp.float32)   # SMEM scalars
    b_vec = bias.astype(jnp.float32)                          # SMEM scalars

    out4 = pl.pallas_call(
        functools.partial(_outconv_kernel, chunk_rows=chunk_rows),
        out_shape=jax.ShapeDtypeStruct((N, C_out, rows, LANES), x_nchw.dtype),
        grid_spec=pltpu.PrefetchScalarGridSpec(
            num_scalar_prefetch=0,
            grid=(N, grid_s),
            in_specs=[
                pl.BlockSpec(memory_space=pltpu.MemorySpace.SMEM),  # weight
                pl.BlockSpec(memory_space=pltpu.MemorySpace.SMEM),  # bias
                pl.BlockSpec((1, C_in, tile_rows, LANES),
                             lambda n, s: (n, 0, s, 0)),
            ],
            out_specs=pl.BlockSpec((1, C_out, tile_rows, LANES),
                                   lambda n, s: (n, 0, s, 0)),
        ),
        # Both grid axes are independent -> shardable across v7x's two TCs.
        # (If a trace ever shows one idle TC on v7x, switch the spatial axis
        # to pltpu.CORE_PARALLEL.)
        compiler_params=pltpu.CompilerParams(
            dimension_semantics=("parallel", "parallel"),
            vmem_limit_bytes=vmem_limit,
        ),
    )(w_mat, b_vec, x4)

    out3 = out4.reshape(N, C_out, hw_lane)   # free trailing-dim merge
    if hw_lane != HW:
        out3 = out3[:, :, :HW]
    return out3.reshape(N, C_out, H, W)


if __name__ == "__main__":
    in_ch, out_ch = 4, 3
    N, H, W = 2, 16, 16

    key = jax.random.PRNGKey(0)
    kx, kw, kb = jax.random.split(key, 3)

    x = jax.random.normal(kx, (N, in_ch, H, W), dtype=jnp.float32)
    # Deterministic parameter init (shapes match nn.Conv2d(in_ch, out_ch, 1)).
    weight = jax.random.normal(kw, (out_ch, in_ch, 1, 1), dtype=jnp.float32) * 0.1
    bias = jax.random.normal(kb, (out_ch,), dtype=jnp.float32) * 0.1

    out = jax.block_until_ready(outconv_forward(x, weight, bias))

    # Reference check with plain JAX (1x1 conv == per-pixel channel matmul + bias).
    ref = (jnp.einsum("nchw,oc->nohw", x, weight.reshape(out_ch, in_ch))
           + bias[None, :, None, None])
    assert out.shape == (N, out_ch, H, W)
    assert jnp.allclose(out, ref, atol=1e-5, rtol=1e-5)

    print("KERNEL_OK")
</pallas_src>

<mosaic_0001>
module attributes {stable_mosaic.version = 11 : i64} {
  func.func @_outconv_kernel(%arg0: i32, %arg1: i32, %arg2: memref<3x4xf32, #tpu.memory_space<smem>>, %arg3: memref<3xf32, #tpu.memory_space<smem>>, %arg4: memref<1x4x2x128xf32, #tpu.memory_space<vmem>>, %arg5: memref<1x3x2x128xf32, #tpu.memory_space<vmem>>) attributes {dimension_semantics = [#tpu.dimension_semantics<parallel>, #tpu.dimension_semantics<parallel>], iteration_bounds = array<i64: 2, 1>, scalar_prefetch = 0 : i64, scratch_operands = 0 : i64, tpu.core_type = #tpu.core_type<tc>, window_params = [{transform_indices = @transform_0, window_bounds = array<i64: 3, 4>}, {transform_indices = @transform_1, window_bounds = array<i64: 3>}, {transform_indices = @transform_2, window_bounds = array<i64: 1, 4, 2, 128>}, {transform_indices = @transform_3, window_bounds = array<i64: 1, 3, 2, 128>}]} {
    %c0 = arith.constant 0 : index
    %c0_0 = arith.constant 0 : index
    %0 = memref.load %arg2[%c0, %c0_0] : memref<3x4xf32, #tpu.memory_space<smem>>
    %c0_1 = arith.constant 0 : index
    %c1 = arith.constant 1 : index
    %1 = memref.load %arg2[%c0_1, %c1] : memref<3x4xf32, #tpu.memory_space<smem>>
    %c0_2 = arith.constant 0 : index
    %c2 = arith.constant 2 : index
    %2 = memref.load %arg2[%c0_2, %c2] : memref<3x4xf32, #tpu.memory_space<smem>>
    %c0_3 = arith.constant 0 : index
    %c3 = arith.constant 3 : index
    %3 = memref.load %arg2[%c0_3, %c3] : memref<3x4xf32, #tpu.memory_space<smem>>
    %c1_4 = arith.constant 1 : index
    %c0_5 = arith.constant 0 : index
    %4 = memref.load %arg2[%c1_4, %c0_5] : memref<3x4xf32, #tpu.memory_space<smem>>
    %c1_6 = arith.constant 1 : index
    %c1_7 = arith.constant 1 : index
    %5 = memref.load %arg2[%c1_6, %c1_7] : memref<3x4xf32, #tpu.memory_space<smem>>
    %c1_8 = arith.constant 1 : index
    %c2_9 = arith.constant 2 : index
    %6 = memref.load %arg2[%c1_8, %c2_9] : memref<3x4xf32, #tpu.memory_space<smem>>
    %c1_10 = arith.constant 1 : index
    %c3_11 = arith.constant 3 : index
    %7 = memref.load %arg2[%c1_10, %c3_11] : memref<3x4xf32, #tpu.memory_space<smem>>
    %c2_12 = arith.constant 2 : index
    %c0_13 = arith.constant 0 : index
    %8 = memref.load %arg2[%c2_12, %c0_13] : memref<3x4xf32, #tpu.memory_space<smem>>
    %c2_14 = arith.constant 2 : index
    %c1_15 = arith.constant 1 : index
    %9 = memref.load %arg2[%c2_14, %c1_15] : memref<3x4xf32, #tpu.memory_space<smem>>
    %c2_16 = arith.constant 2 : index
    %c2_17 = arith.constant 2 : index
    %10 = memref.load %arg2[%c2_16, %c2_17] : memref<3x4xf32, #tpu.memory_space<smem>>
    %c2_18 = arith.constant 2 : index
    %c3_19 = arith.constant 3 : index
    %11 = memref.load %arg2[%c2_18, %c3_19] : memref<3x4xf32, #tpu.memory_space<smem>>
    %c0_20 = arith.constant 0 : index
    %12 = memref.load %arg3[%c0_20] : memref<3xf32, #tpu.memory_space<smem>>
    %c1_21 = arith.constant 1 : index
    %13 = memref.load %arg3[%c1_21] : memref<3xf32, #tpu.memory_space<smem>>
    %c2_22 = arith.constant 2 : index
    %14 = memref.load %arg3[%c2_22] : memref<3xf32, #tpu.memory_space<smem>>
    %c0_i32 = arith.constant 0 : i32
    %c2_i32 = arith.constant 2 : i32
    %15 = arith.muli %c0_i32, %c2_i32 : i32
    %16 = tpu.assume_multiple %15, 2 : i32
    %c0_23 = arith.constant 0 : index
    %c0_24 = arith.constant 0 : index
    %17 = arith.index_cast %16 : i32 to index
    %c0_25 = arith.constant 0 : index
    %18 = vector.load %arg4[%c0_23, %c0_24, %17, %c0_25] : memref<1x4x2x128xf32, #tpu.memory_space<vmem>>, vector<1x1x2x128xf32>
    %19 = vector.shape_cast %18 : vector<1x1x2x128xf32> to vector<2x128xf32>
    %c0_26 = arith.constant 0 : index
    %c1_27 = arith.constant 1 : index
    %20 = arith.index_cast %16 : i32 to index
    %c0_28 = arith.constant 0 : index
    %21 = vector.load %arg4[%c0_26, %c1_27, %20, %c0_28] : memref<1x4x2x128xf32, #tpu.memory_space<vmem>>, vector<1x1x2x128xf32>
    %22 = vector.shape_cast %21 : vector<1x1x2x128xf32> to vector<2x128xf32>
    %c0_29 = arith.constant 0 : index
    %c2_30 = arith.constant 2 : index
    %23 = arith.index_cast %16 : i32 to index
    %c0_31 = arith.constant 0 : index
    %24 = vector.load %arg4[%c0_29, %c2_30, %23, %c0_31] : memref<1x4x2x128xf32, #tpu.memory_space<vmem>>, vector<1x1x2x128xf32>
    %25 = vector.shape_cast %24 : vector<1x1x2x128xf32> to vector<2x128xf32>
    %c0_32 = arith.constant 0 : index
    %c3_33 = arith.constant 3 : index
    %26 = arith.index_cast %16 : i32 to index
    %c0_34 = arith.constant 0 : index
    %27 = vector.load %arg4[%c0_32, %c3_33, %26, %c0_34] : memref<1x4x2x128xf32, #tpu.memory_space<vmem>>, vector<1x1x2x128xf32>
    %28 = vector.shape_cast %27 : vector<1x1x2x128xf32> to vector<2x128xf32>
    %29 = vector.broadcast %0 : f32 to vector<2x128xf32>
    %30 = arith.mulf %19, %29 : vector<2x128xf32>
    %31 = vector.broadcast %12 : f32 to vector<2x128xf32>
    %32 = arith.addf %30, %31 : vector<2x128xf32>
    %33 = vector.broadcast %1 : f32 to vector<2x128xf32>
    %34 = arith.mulf %22, %33 : vector<2x128xf32>
    %35 = arith.addf %32, %34 : vector<2x128xf32>
    %36 = vector.broadcast %2 : f32 to vector<2x128xf32>
    %37 = arith.mulf %25, %36 : vector<2x128xf32>
    %38 = arith.addf %35, %37 : vector<2x128xf32>
    %39 = vector.broadcast %3 : f32 to vector<2x128xf32>
    %40 = arith.mulf %28, %39 : vector<2x128xf32>
    %41 = arith.addf %38, %40 : vector<2x128xf32>
    %c0_35 = arith.constant 0 : index
    %c0_36 = arith.constant 0 : index
    %42 = arith.index_cast %16 : i32 to index
    %c0_37 = arith.constant 0 : index
    %43 = vector.load %arg5[%c0_35, %c0_36, %42, %c0_37] : memref<1x3x2x128xf32, #tpu.memory_space<vmem>>, vector<1x1x2x128xf32>
    %44 = vector.shape_cast %43 : vector<1x1x2x128xf32> to vector<2x128xf32>
    %45 = vector.shape_cast %41 : vector<2x128xf32> to vector<1x1x2x128xf32>
    tpu.vector_store %arg5[%c0_35, %c0_36, %42, %c0_37], %45 {strides = array<i32>} : memref<1x3x2x128xf32, #tpu.memory_space<vmem>>, vector<1x1x2x128xf32>,
    %46 = vector.broadcast %4 : f32 to vector<2x128xf32>
    %47 = arith.mulf %19, %46 : vector<2x128xf32>
    %48 = vector.broadcast %13 : f32 to vector<2x128xf32>
    %49 = arith.addf %47, %48 : vector<2x128xf32>
    %50 = vector.broadcast %5 : f32 to vector<2x128xf32>
    %51 = arith.mulf %22, %50 : vector<2x128xf32>
    %52 = arith.addf %49, %51 : vector<2x128xf32>
    %53 = vector.broadcast %6 : f32 to vector<2x128xf32>
    %54 = arith.mulf %25, %53 : vector<2x128xf32>
    %55 = arith.addf %52, %54 : vector<2x128xf32>
    %56 = vector.broadcast %7 : f32 to vector<2x128xf32>
    %57 = arith.mulf %28, %56 : vector<2x128xf32>
    %58 = arith.addf %55, %57 : vector<2x128xf32>
    %c0_38 = arith.constant 0 : index
    %c1_39 = arith.constant 1 : index
    %59 = arith.index_cast %16 : i32 to index
    %c0_40 = arith.constant 0 : index
    %60 = vector.load %arg5[%c0_38, %c1_39, %59, %c0_40] : memref<1x3x2x128xf32, #tpu.memory_space<vmem>>, vector<1x1x2x128xf32>
    %61 = vector.shape_cast %60 : vector<1x1x2x128xf32> to vector<2x128xf32>
    %62 = vector.shape_cast %58 : vector<2x128xf32> to vector<1x1x2x128xf32>
    tpu.vector_store %arg5[%c0_38, %c1_39, %59, %c0_40], %62 {strides = array<i32>} : memref<1x3x2x128xf32, #tpu.memory_space<vmem>>, vector<1x1x2x128xf32>,
    %63 = vector.broadcast %8 : f32 to vector<2x128xf32>
    %64 = arith.mulf %19, %63 : vector<2x128xf32>
    %65 = vector.broadcast %14 : f32 to vector<2x128xf32>
    %66 = arith.addf %64, %65 : vector<2x128xf32>
    %67 = vector.broadcast %9 : f32 to vector<2x128xf32>
    %68 = arith.mulf %22, %67 : vector<2x128xf32>
    %69 = arith.addf %66, %68 : vector<2x128xf32>
    %70 = vector.broadcast %10 : f32 to vector<2x128xf32>
    %71 = arith.mulf %25, %70 : vector<2x128xf32>
    %72 = arith.addf %69, %71 : vector<2x128xf32>
    %73 = vector.broadcast %11 : f32 to vector<2x128xf32>
    %74 = arith.mulf %28, %73 : vector<2x128xf32>
    %75 = arith.addf %72, %74 : vector<2x128xf32>
    %c0_41 = arith.constant 0 : index
    %c2_42 = arith.constant 2 : index
    %76 = arith.index_cast %16 : i32 to index
    %c0_43 = arith.constant 0 : index
    %77 = vector.load %arg5[%c0_41, %c2_42, %76, %c0_43] : memref<1x3x2x128xf32, #tpu.memory_space<vmem>>, vector<1x1x2x128xf32>
    %78 = vector.shape_cast %77 : vector<1x1x2x128xf32> to vector<2x128xf32>
    %79 = vector.shape_cast %75 : vector<2x128xf32> to vector<1x1x2x128xf32>
    tpu.vector_store %arg5[%c0_41, %c2_42, %76, %c0_43], %79 {strides = array<i32>} : memref<1x3x2x128xf32, #tpu.memory_space<vmem>>, vector<1x1x2x128xf32>,
    %c1_i32 = arith.constant 1 : i32
    return
  }
  func.func @transform_0(%arg0: i32, %arg1: i32) -> (i32, i32) {
    %c0_i32 = arith.constant 0 : i32
    %c0_i32_0 = arith.constant 0 : i32
    %c0_i32_1 = arith.constant 0 : i32
    return %c0_i32, %c0_i32_0 : i32, i32
  }
  func.func @transform_1(%arg0: i32, %arg1: i32) -> i32 {
    %c0_i32 = arith.constant 0 : i32
    %c0_i32_0 = arith.constant 0 : i32
    return %c0_i32 : i32
  }
  func.func @transform_2(%arg0: i32, %arg1: i32) -> (i32, i32, i32, i32) {
    %c0_i32 = arith.constant 0 : i32
    %c0_i32_0 = arith.constant 0 : i32
    %c0_i32_1 = arith.constant 0 : i32
    return %arg0, %c0_i32, %arg1, %c0_i32_0 : i32, i32, i32, i32
  }
  func.func @transform_3(%arg0: i32, %arg1: i32) -> (i32, i32, i32, i32) {
    %c0_i32 = arith.constant 0 : i32
    %c0_i32_0 = arith.constant 0 : i32
    %c0_i32_1 = arith.constant 0 : i32
    return %arg0, %c0_i32, %arg1, %c0_i32_0 : i32, i32, i32, i32
  }
}

</mosaic_0001>

<llo_original>
// kernel: outconv_forward.1
$region0: #{outconv_forward.1}
  #allocation0 [shape = 'u32[]', space=smem, size = 0x4, offset = 0x4, fixed_abs, tag = 'smem constant byte address 0x4 - core index']
  #allocation1 [shape = 'u32[72,128]{1,0:T(1,128)}', space=vmem, size = 0x9000, scoped, tag = 'internal scratch']
  %s0 = inlined_call_operand.vmem [shape: f32[3,4], index: 0, kind: input, shape index: {}]
  %s1 = inlined_call_operand.vmem [shape: f32[3], index: 1, kind: input, shape index: {}]
  %s2 = inlined_call_operand.vmem [shape: f32[2,4,2,128], index: 2, kind: input, shape index: {}]
  %s3 = inlined_call_operand.vmem [shape: f32[2,3,2,128], index: 3, kind: output, shape index: {}]
  %s4 = sld [smem:[#allocation0]]
  $region53: #{outconv_forward.1} parent=0
    _
  %s6 = ssub.s32 1, %s4
  %s7 = scalar_select 0, %s6, %s4
  $region1: #{outconv_forward.1} parent=0
    #allocation2 [shape = 'u8[2048]{0}', space=smem, size = 0x800, scoped, tag = 'input window, operand 0, single buffered']
    #allocation3 [shape = 's32[2]{0}', space=sflag, size = 0x8, scoped, tag = 'scoped memory for outconv_forward.1']
    #allocation4 [shape = 'u8[512]{0}', space=smem, size = 0x200, scoped, tag = 'input window, operand 1, single buffered']
    #allocation5 [shape = 's32[1]{0}', space=sflag, size = 0x4, scoped, tag = 'scoped memory for outconv_forward.1']
    %8 = vsyncpa [#allocation3], 0
    %9 = vsyncpa [#allocation5], 0
    loop: start=0, step=1, limit=4
    $region2: #{outconv_forward.1} parent=1 // loop_pre_header
      _
    $region3: #{outconv_forward.1} parent=1 // loop_header
      %s11 = sphi 0, %s15
      %p12 = scmp.ge.s32.totalorder %s11, 4
      %s18 = sphi 0, %s30
      %s19 = sphi 0, %s26
      %s20 = sphi 0, %s18
      %s21 = sphi 0, %s19
      %s22 = sphi 0, %s20
      %s23 = sphi 0, %s21
      %s31 = sphi 0, %s31
      %s33 = sphi 0, %s31
      %s34 = sphi 0, %s33
      %s48 = sphi 0, %s34
      %s52 = sphi 0, %s52
      %s54 = sphi 0, %s52
      %s55 = sphi 0, %s54
      %s69 = sphi 0, %s55
      %s77 = sphi 0, %s79
      %s80 = sphi 0, %s77
      %s81 = sphi 0, %s80
      %s97 = sphi 0, %s81
      %s105 = sphi 0, %s107
      %s108 = sphi 0, %s105
      %s109 = sphi 0, %s108
      %s125 = sphi 0, %s109
    $region4: #{outconv_forward.1} parent=1 // loop_header_branch
      %14 = sbr.rel (%p12) target = $region8
    $region5: #{outconv_forward.1} parent=1 // loop_body
      %s16 = ssub.s32 %s11, 1
      %s17 = ssub.s32 %s11, 2
      %s24 = sadd.s32 1, %s19
      %p25 = scmp.ge.s32.totalorder %s24, 1
      %s26 = scalar_select %p25, 0, %s24
      %s27 = sadd.s32 1, %s18
      %s28 = scalar_select %p25, %s27, %s18
      %p29 = scmp.ge.s32.totalorder %s28, 2
      %s30 = scalar_select %p29, 0, %s28
      %s32 = sadd.s32 %s31, 1
      %p35 = scmp.eq.s32.totalorder %s11, 1
      %p36 = scmp.ne.s32.totalorder %s31, %s33
      %p37 = scmp.eq.s32.totalorder %s11, 0
      %p38 = por %p36, %p37
      %p39 = scmp.ne.s32.totalorder %s31, %s33
      %p40 = scmp.eq.s32.totalorder %s16, 1
      %p41 = por %p39, %p40
      %p42 = scmp.ne.s32.totalorder %s33, %s34
      %p43 = scmp.eq.s32.totalorder %s16, 0
      %p44 = por %p42, %p43
      %p45 = scmp.ne.s32.totalorder %s33, %s34
      %p46 = scmp.eq.s32.totalorder %s17, 1
      %p47 = por %p45, %p46
      %p49 = scmp.ne.s32.totalorder %s34, %s48
      %p50 = scmp.eq.s32.totalorder %s17, 0
      %p51 = por %p49, %p50
      %s53 = sadd.s32 %s52, 1
      %p56 = scmp.eq.s32.totalorder %s11, 1
      %p57 = scmp.ne.s32.totalorder %s52, %s54
      %p58 = scmp.eq.s32.totalorder %s11, 0
      %p59 = por %p57, %p58
      %p60 = scmp.ne.s32.totalorder %s52, %s54
      %p61 = scmp.eq.s32.totalorder %s16, 1
      %p62 = por %p60, %p61
      %p63 = scmp.ne.s32.totalorder %s54, %s55
      %p64 = scmp.eq.s32.totalorder %s16, 0
      %p65 = por %p63, %p64
      %p66 = scmp.ne.s32.totalorder %s54, %s55
      %p67 = scmp.eq.s32.totalorder %s17, 1
      %p68 = por %p66, %p67
      %p70 = scmp.ne.s32.totalorder %s55, %s69
      %p71 = scmp.eq.s32.totalorder %s17, 0
      %p72 = por %p70, %p71
      %s73 = ssub.s32 %s18, %s30
      %s74 = ssub.s32 %s19, %s26
      %s75 = sor.u32 %s73, %s74
      %p76 = scmp.eq.s32.totalorder %s75, 0
      %s78 = sadd.s32 %s77, 1
      %s79 = scalar_select %p76, %s77, %s78
      %p82 = pneg %p76
      %p83 = scmp.eq.s32.totalorder %s11, 1
      %p84 = por %p82, %p83
      %p85 = scmp.ne.s32.totalorder %s77, %s80
      %p86 = scmp.eq.s32.totalorder %s11, 0
      %p87 = por %p85, %p86
      %p88 = scmp.ne.s32.totalorder %s77, %s80
      %p89 = scmp.eq.s32.totalorder %s16, 1
      %p90 = por %p88, %p89
      %p91 = scmp.ne.s32.totalorder %s80, %s81
      %p92 = scmp.eq.s32.totalorder %s16, 0
      %p93 = por %p91, %p92
      %p94 = scmp.ne.s32.totalorder %s80, %s81
      %p95 = scmp.eq.s32.totalorder %s17, 1
      %p96 = por %p94, %p95
      %p98 = scmp.ne.s32.totalorder %s81, %s97
      %p99 = scmp.eq.s32.totalorder %s17, 0
      %p100 = por %p98, %p99
      %s101 = ssub.s32 %s18, %s30
      %s102 = ssub.s32 %s19, %s26
      %s103 = sor.u32 %s101, %s102
      %p104 = scmp.eq.s32.totalorder %s103, 0
      %s106 = sadd.s32 %s105, 1
      %s107 = scalar_select %p104, %s105, %s106
      %p110 = pneg %p104
      %p111 = scmp.eq.s32.totalorder %s11, 1
      %p112 = por %p110, %p111
      %p113 = scmp.ne.s32.totalorder %s105, %s108
      %p114 = scmp.eq.s32.totalorder %s11, 0
      %p115 = por %p113, %p114
      %p116 = scmp.ne.s32.totalorder %s105, %s108
      %p117 = scmp.eq.s32.totalorder %s16, 1
      %p118 = por %p116, %p117
      %p119 = scmp.ne.s32.totalorder %s108, %s109
      %p120 = scmp.eq.s32.totalorder %s16, 0
      %p121 = por %p119, %p120
      %p122 = scmp.ne.s32.totalorder %s108, %s109
      %p123 = scmp.eq.s32.totalorder %s17, 1
      %p124 = por %p122, %p123
      %p126 = scmp.ne.s32.totalorder %s109, %s125
      %p127 = scmp.eq.s32.totalorder %s17, 0
      %p128 = por %p126, %p127
      %p129 = scmp.le.s32.totalorder 1, %s11
      %p130 = scmp.lt.s32.totalorder %s11, 3
      %p131 = pnand %p129, %p130
      %p132 = pneg %p131
      // Predicated region
      $region9: #{outconv_forward.1} parent=5 // pred_check
        _
      $region10: #{outconv_forward.1} parent=5 // pred_check_branch
        %134 = sbr.rel (%p131) target = $region12
      $region11: #{outconv_forward.1} parent=5 // pred_region
        %s135 = ssub.s32 %s11, 1
        // Predicated region
        $region13: #{outconv_forward.1} parent=11 // pred_check
          %p136 = pneg %p44
        $region14: #{outconv_forward.1} parent=11 // pred_check_branch
          %138 = sbr.rel (%p136) target = $region16
        $region15: #{outconv_forward.1} parent=11 // pred_region
          %140 = vsyncadd [#allocation3], 0
          %s142 = sshll.u32 %s0, 4
          %s143 = int_to_ptr.vmem [resolvable:$true] %s142
          %145 = dma.vmem_to_smem %s143, 64, [#allocation2], [#allocation3]
        $region16: #{outconv_forward.1} parent=11 // pred_fallthru
          _
        // Predicated region
        $region17: #{outconv_forward.1} parent=11 // pred_check
          %p146 = pneg %p65
        $region18: #{outconv_forward.1} parent=11 // pred_check_branch
          %148 = sbr.rel (%p146) target = $region20
        $region19: #{outconv_forward.1} parent=11 // pred_region
          %150 = vsyncadd [#allocation5], 0
          %s152 = sshll.u32 %s1, 4
          %s153 = int_to_ptr.vmem [resolvable:$true] %s152
          %155 = dma.vmem_to_smem %s153, 16, [#allocation4], [#allocation5]
        $region20: #{outconv_forward.1} parent=11 // pred_fallthru
          _
      $region12: #{outconv_forward.1} parent=5 // pred_fallthru
        _
      %p156 = scmp.lt.s32.totalorder %s11, 2
      // Predicated region
      $region21: #{outconv_forward.1} parent=5 // pred_check
        %p157 = pneg %p156
      $region22: #{outconv_forward.1} parent=5 // pred_check_branch
        %159 = sbr.rel (%p157) target = $region24
      $region23: #{outconv_forward.1} parent=5 // pred_region
        // Predicated region
        $region25: #{outconv_forward.1} parent=23 // pred_check
          %p160 = pneg %p87
        $region26: #{outconv_forward.1} parent=23 // pred_check_branch
          %162 = sbr.rel (%p160) target = $region28
        $region27: #{outconv_forward.1} parent=23 // pred_region
          %p163 = scmp.lt.s32.totalorder %s18, 1
          %s164 = scalar_select %p163, %s18, 1
          %p165 = scmp.lt.s32.totalorder %s19, 0
          %s166 = scalar_select %p165, %s19, 0
          %s167 = smul.addr %s164, 4
          %s168 = sadd.s32 %s166, %s167
          %s169 = smul.addr %s168, 2
          %s170 = scalar_lea.vmem %s2, %s169
        $region28: #{outconv_forward.1} parent=23 // pred_fallthru
          _
      $region24: #{outconv_forward.1} parent=5 // pred_fallthru
        _
      %p171 = scmp.le.s32.totalorder 1, %s11
      %p172 = scmp.lt.s32.totalorder %s11, 3
      %p173 = pnand %p171, %p172
      %p174 = pneg %p173
      // Predicated region
      $region29: #{outconv_forward.1} parent=5 // pred_check
        _
      $region30: #{outconv_forward.1} parent=5 // pred_check_branch
        %176 = sbr.rel (%p173) target = $region32
      $region31: #{outconv_forward.1} parent=5 // pred_region
        %s177 = ssub.s32 %s11, 1
        // Predicated region
        $region33: #{outconv_forward.1} parent=31 // pred_check
          %p178 = pneg %p44
        $region34: #{outconv_forward.1} parent=31 // pred_check_branch
          %180 = sbr.rel (%p178) target = $region36
        $region35: #{outconv_forward.1} parent=31 // pred_region
          %182 = dma.done [#allocation3], 64
        $region36: #{outconv_forward.1} parent=31 // pred_fallthru
          _
        // Predicated region
        $region37: #{outconv_forward.1} parent=31 // pred_check
          %p183 = pneg %p65
        $region38: #{outconv_forward.1} parent=31 // pred_check_branch
          %185 = sbr.rel (%p183) target = $region40
        $region39: #{outconv_forward.1} parent=31 // pred_region
          %187 = dma.done [#allocation5], 16
        $region40: #{outconv_forward.1} parent=31 // pred_fallthru
          _
        %188 = sfence
        %p189 = pneg %p44
        %p190 = pneg %p41
        %p191 = pneg %p65
        %p192 = pneg %p62
        %p193 = scmp.lt.s32.totalorder %s20, 1
        %s194 = scalar_select %p193, %s20, 1
        %p195 = scmp.lt.s32.totalorder %s21, 0
        %s196 = scalar_select %p195, %s21, 0
        %s197 = smul.addr %s194, 4
        %s198 = sadd.s32 %s196, %s197
        %s199 = smul.addr %s198, 2
        %s200 = scalar_lea.vmem %s2, %s199
        %p201 = pneg %p93
        %p202 = pneg %p90
        %p203 = pneg %p121
        %p204 = pneg %p118
        %p205 = scmp.lt.s32.totalorder %s20, 1
        %s206 = scalar_select %p205, %s20, 1
        %p207 = scmp.lt.s32.totalorder %s21, 0
        %s208 = scalar_select %p207, %s21, 0
        %s209 = smul.addr %s206, 3
        %s210 = sadd.s32 %s208, %s209
        %s211 = smul.addr %s210, 2
        %s212 = scalar_lea.vmem %s3, %s211
        %p213 = scmp.lt.s32.totalorder %s20, 1
        %s214 = scalar_select %p213, %s20, 1
        %p215 = scmp.lt.s32.totalorder %s21, 0
        %s216 = scalar_select %p215, %s21, 0
        %s217 = smul.addr %s214, 4
        %s218 = sadd.s32 %s216, %s217
        %s219 = smul.addr %s218, 2
        %s220 = scalar_lea.vmem %s2, %s219
        %p221 = scmp.lt.s32.totalorder %s20, 1
        %s222 = scalar_select %p221, %s20, 1
        %p223 = scmp.lt.s32.totalorder %s21, 0
        %s224 = scalar_select %p223, %s21, 0
        %s225 = smul.addr %s222, 3
        %s226 = sadd.s32 %s224, %s225
        %s227 = smul.addr %s226, 2
        %s228 = scalar_lea.vmem %s3, %s227
        %s229 = sld [smem:[#allocation2]]
        %s230 = sld [smem:[#allocation2 + $0x1]]
        %s231 = sld [smem:[#allocation2 + $0x2]]
        %s232 = sld [smem:[#allocation2 + $0x3]]
        %s233 = sld [smem:[#allocation2 + $0x80]]
        %s234 = sld [smem:[#allocation2 + $0x81]]
        %s235 = sld [smem:[#allocation2 + $0x82]]
        %s236 = sld [smem:[#allocation2 + $0x83]]
        %s237 = sld [smem:[#allocation2 + $0x100]]
        %s238 = sld [smem:[#allocation2 + $0x101]]
        %s239 = sld [smem:[#allocation2 + $0x102]]
        %s240 = sld [smem:[#allocation2 + $0x103]]
        %s241 = sld [smem:[#allocation4]]
        %s242 = sld [smem:[#allocation4 + $0x1]]
        %s243 = sld [smem:[#allocation4 + $0x2]]
        %v244 = vld [vmem:[%s220] sm:$0x3]
        %s245 = sadd.s32 0, 2
        %s246 = scalar_lea.vmem %s220, %s245
        %v247 = vld [vmem:[%s246] sm:$0x3]
        %s248 = sadd.s32 0, 4
        %s249 = scalar_lea.vmem %s220, %s248
        %v250 = vld [vmem:[%s249] sm:$0x3]
        %s251 = sadd.s32 0, 6
        %s252 = scalar_lea.vmem %s220, %s251
        %v253 = vld [vmem:[%s252] sm:$0x3]
        %v254 = vstv %s229
        %v255 = vmul.f32 %v244, %v254
        %v256 = vstv %s241
        %v257 = vadd.f32 %v255, %v256
        %v258 = vstv %s230
        %v259 = vmul.f32 %v247, %v258
        %v260 = vadd.f32 %v257, %v259
        %v261 = vstv %s231
        %v262 = vmul.f32 %v250, %v261
        %v263 = vadd.f32 %v260, %v262
        %v264 = vstv %s232
        %v265 = vmul.f32 %v253, %v264
        %v266 = vadd.f32 %v263, %v265
        %267 = vst [vmem:[%s228] sm:$0x3] %v266
        %v268 = vstv %s233
        %v269 = vmul.f32 %v244, %v268
        %v270 = vstv %s242
        %v271 = vadd.f32 %v269, %v270
        %v272 = vstv %s234
        %v273 = vmul.f32 %v247, %v272
        %v274 = vadd.f32 %v271, %v273
        %v275 = vstv %s235
        %v276 = vmul.f32 %v250, %v275
        %v277 = vadd.f32 %v274, %v276
        %v278 = vstv %s236
        %v279 = vmul.f32 %v253, %v278
        %v280 = vadd.f32 %v277, %v279
        %s281 = scalar_lea.vmem %s228, %s245
        %282 = vst [vmem:[%s281] sm:$0x3] %v280
        %v283 = vstv %s237
        %v284 = vmul.f32 %v244, %v283
        %v285 = vstv %s243
        %v286 = vadd.f32 %v284, %v285
        %v287 = vstv %s238
        %v288 = vmul.f32 %v247, %v287
        %v289 = vadd.f32 %v286, %v288
        %v290 = vstv %s239
        %v291 = vmul.f32 %v250, %v290
        %v292 = vadd.f32 %v289, %v291
        %v293 = vstv %s240
        %v294 = vmul.f32 %v253, %v293
        %v295 = vadd.f32 %v292, %v294
        %s296 = scalar_lea.vmem %s228, %s248
        %297 = vst [vmem:[%s296] sm:$0x3] %v295
        %p298 = scmp.lt.s32.totalorder %s20, 1
        %s299 = scalar_select %p298, %s20, 1
        %p300 = scmp.lt.s32.totalorder %s21, 0
        %s301 = scalar_select %p300, %s21, 0
        %s302 = smul.addr %s299, 3
        %s303 = sadd.s32 %s301, %s302
        %s304 = smul.addr %s303, 2
        %s305 = scalar_lea.vmem %s3, %s304
        // Predicated region
        $region41: #{outconv_forward.1} parent=31 // pred_check
          %p306 = pneg %p118
        $region42: #{outconv_forward.1} parent=31 // pred_check_branch
          %308 = sbr.rel (%p306) target = $region44
        $region43: #{outconv_forward.1} parent=31 // pred_region
          _
        $region44: #{outconv_forward.1} parent=31 // pred_fallthru
          _
      $region32: #{outconv_forward.1} parent=5 // pred_fallthru
        _
      %p309 = scmp.le.s32.totalorder 2, %s11
      // Predicated region
      $region45: #{outconv_forward.1} parent=5 // pred_check
        %p310 = pneg %p309
      $region46: #{outconv_forward.1} parent=5 // pred_check_branch
        %312 = sbr.rel (%p310) target = $region48
      $region47: #{outconv_forward.1} parent=5 // pred_region
        %s313 = ssub.s32 %s11, 2
        // Predicated region
        $region49: #{outconv_forward.1} parent=47 // pred_check
          %p314 = pneg %p124
        $region50: #{outconv_forward.1} parent=47 // pred_check_branch
          %316 = sbr.rel (%p314) target = $region52
        $region51: #{outconv_forward.1} parent=47 // pred_region
          %p317 = scmp.lt.s32.totalorder %s22, 1
          %s318 = scalar_select %p317, %s22, 1
          %p319 = scmp.lt.s32.totalorder %s23, 0
          %s320 = scalar_select %p319, %s23, 0
          %s321 = smul.addr %s318, 3
          %s322 = sadd.s32 %s320, %s321
          %s323 = smul.addr %s322, 2
          %s324 = scalar_lea.vmem %s3, %s323
        $region52: #{outconv_forward.1} parent=47 // pred_fallthru
          _
      $region48: #{outconv_forward.1} parent=5 // pred_fallthru
        _
    $region6: #{outconv_forward.1} parent=1 // loop_footer
      %s15 = sadd.s32 1, %s11
    $region7: #{outconv_forward.1} parent=1 // loop_footer_branch
      %10 = sbr.rel target = $region3
    $region8: #{outconv_forward.1} parent=1 // loop_exit
      _
    %325 = vsyncpa [#allocation3], 1
    %s326 = scalar_lea.sflag [#allocation3], 1
    %327 = vsyncpa %s326, 1
    %328 = vsyncpa [#allocation5], 1

</llo_original>
